<compile_context>
chip_gen: v7x
topology: tpu7x:2x2x1
jax: 0.10.0
libtpu: 0.0.40
codegen_flags: <defaults>
</compile_context>

<pallas_src>
import functools

import jax
import jax.numpy as jnp
from jax import lax
from jax.experimental import pallas as pl
from jax.experimental.pallas import tpu as pltpu


def _matmul_bn_kernel(p_ref, w_ref, b_ref, o_ref):
    # p_ref: (K, TM)   im2col patches tile (M on the lane axis)
    # w_ref: (OC, K)   conv weights with BN scale folded in (resident)
    # b_ref: (OC, 1)   folded BN bias (f32, resident)
    # o_ref: (OC, TM)  lane-dense output tile
    acc = jnp.dot(w_ref[...], p_ref[...], preferred_element_type=jnp.float32)
    o_ref[...] = (acc + b_ref[...]).astype(o_ref.dtype)


def _im2col_km(x, kh, kw, stride, padding, dilation):
    """x: (N, C, H, W) -> patches (C*KH*KW, N*OH*OW), plus (OH, OW)."""
    n, c, h, w = x.shape
    oh = (h + 2 * padding - dilation * (kh - 1) - 1) // stride + 1
    ow = (w + 2 * padding - dilation * (kw - 1) - 1) // stride + 1
    xp = jnp.pad(x, ((0, 0), (0, 0), (padding, padding), (padding, padding)))
    cols = []
    for i in range(kh):
        for j in range(kw):
            hi = i * dilation
            wj = j * dilation
            cols.append(
                xp[:, :, hi:hi + stride * oh:stride, wj:wj + stride * ow:stride]
            )  # (N, C, OH, OW)
    # (KH*KW, N, C, OH, OW) -> (C, KH*KW, N, OH, OW) -> (C*KH*KW, N*OH*OW)
    # K ordering (c, kh, kw) matches weight.reshape(OC, C*KH*KW);
    # M ordering (n, oh, ow) matches the final reshape to (OC, N, OH, OW).
    patches = jnp.stack(cols, axis=0)
    patches = patches.transpose(2, 0, 1, 3, 4)
    patches = patches.reshape(c * kh * kw, n * oh * ow)
    return patches, oh, ow


def _pick_tm(m, k_dim, oc, in_bytes, out_bytes):
    """Largest TM (multiple of 128, <=2048) whose double-buffered streaming
    tiles stay within a v7x-safe VMEM budget."""
    budget = 16 * 1024 * 1024  # bytes for live streaming buffers (2x patch + 2x out)
    per_col = 2 * (k_dim * in_bytes + oc * out_bytes)
    tm = budget // max(per_col, 1)
    tm = max(128, min(2048, (tm // 128) * 128))
    m_up = pl.cdiv(m, 128) * 128
    return min(tm, m_up)


@functools.partial(jax.jit,
                   static_argnames=("stride", "padding", "dilation",
                                    "compute_dtype"))
def basic_conv2d(x, weight, gamma, beta, running_mean, running_var,
                 stride=1, padding=0, dilation=1, eps=1e-5,
                 compute_dtype=jnp.bfloat16):
    """x: (N, Cin, H, W) NCHW; weight: (Cout, Cin, KH, KW). Returns NCHW f32."""
    n, cin, _, _ = x.shape
    cout, _, kh, kw = weight.shape

    # Fold eval-mode BN:  BN(conv(x, W)) = conv(x, W * scale) + bias
    scale = (gamma / jnp.sqrt(running_var + eps)).astype(jnp.float32)      # (OC,)
    bias = (beta.astype(jnp.float32) - running_mean * scale)               # (OC,)
    w2d = (weight.reshape(cout, cin * kh * kw).astype(jnp.float32)
           * scale[:, None]).astype(compute_dtype)                         # (OC, K)
    bias2d = bias.reshape(cout, 1)                                         # (OC, 1)

    # im2col in the (narrow) compute dtype, laid out (K, M) so M is lane-dense.
    patches, oh, ow = _im2col_km(x.astype(compute_dtype),
                                 kh, kw, stride, padding, dilation)
    k_dim, m = patches.shape

    in_bytes = jnp.dtype(compute_dtype).itemsize
    tm = _pick_tm(m, k_dim, cout, in_bytes, 4)
    m_pad = pl.cdiv(m, tm) * tm
    if m_pad != m:
        patches = jnp.pad(patches, ((0, 0), (0, m_pad - m)))

    out2d = pl.pallas_call(
        _matmul_bn_kernel,
        out_shape=jax.ShapeDtypeStruct((cout, m_pad), jnp.float32),
        grid_spec=pltpu.PrefetchScalarGridSpec(
            num_scalar_prefetch=0,
            grid=(m_pad // tm,),
            in_specs=[
                pl.BlockSpec((k_dim, tm), lambda i: (0, i)),   # streams over M
                pl.BlockSpec((cout, k_dim), lambda i: (0, 0)),  # resident
                pl.BlockSpec((cout, 1), lambda i: (0, 0)),      # resident
            ],
            out_specs=pl.BlockSpec((cout, tm), lambda i: (0, i)),
        ),
        compiler_params=pltpu.CompilerParams(
            dimension_semantics=("parallel",),
            vmem_limit_bytes=32 * 1024 * 1024,
            # Let XLA fuse the im2col producer into the patches operand.
            allow_input_fusion=[True, False, False],
        ),
    )(patches, w2d, bias2d)

    # (OC, M) -> (OC, N, OH, OW) -> (N, OC, OH, OW): leading-axis swap only,
    # each OH*OW chunk stays contiguous.
    out = out2d[:, :m].reshape(cout, n, oh, ow).transpose(1, 0, 2, 3)
    return out


if __name__ == "__main__":
    # BasicConv2d(in_planes=4, out_planes=8, kernel_size=3, stride=1, padding=1)
    in_planes, out_planes, ksize, stride, padding, dilation = 4, 8, 3, 1, 1, 1
    N, H, W = 2, 16, 16

    key = jax.random.PRNGKey(0)
    kx, kw, kg, kb, km, kv = jax.random.split(key, 6)

    x = jax.random.normal(kx, (N, in_planes, H, W), dtype=jnp.float32)
    weight = jax.random.normal(
        kw, (out_planes, in_planes, ksize, ksize), dtype=jnp.float32) * 0.1
    gamma = jax.random.normal(kg, (out_planes,), dtype=jnp.float32) * 0.1 + 1.0
    beta = jax.random.normal(kb, (out_planes,), dtype=jnp.float32) * 0.1
    running_mean = jax.random.normal(km, (out_planes,), dtype=jnp.float32) * 0.1
    running_var = jax.nn.softplus(
        jax.random.normal(kv, (out_planes,), dtype=jnp.float32)) + 0.5

    # Reference in plain JAX (full f32, eval-mode BN -- true module semantics).
    conv_ref = lax.conv_general_dilated(
        x, weight, window_strides=(stride, stride),
        padding=[(padding, padding), (padding, padding)],
        rhs_dilation=(dilation, dilation),
        dimension_numbers=("NCHW", "OIHW", "NCHW"))
    scale_ref = gamma / jnp.sqrt(running_var + 1e-5)
    bias_ref = beta - running_mean * scale_ref
    ref = conv_ref * scale_ref[None, :, None, None] + bias_ref[None, :, None, None]

    # Default bf16 operands (f32 accumulate).
    out_bf16 = basic_conv2d(x, weight, gamma, beta, running_mean, running_var,
                            stride=stride, padding=padding, dilation=dilation)
    out_bf16 = jax.block_until_ready(out_bf16)
    assert out_bf16.shape == (N, out_planes, H, W), out_bf16.shape
    assert jnp.allclose(out_bf16, ref, atol=3e-2, rtol=3e-2), \
        "bf16 kernel mismatch vs reference"

    # f32 operands for a tight-tolerance correctness check of the same kernel.
    out_f32 = basic_conv2d(x, weight, gamma, beta, running_mean, running_var,
                           stride=stride, padding=padding, dilation=dilation,
                           compute_dtype=jnp.float32)
    out_f32 = jax.block_until_ready(out_f32)
    assert jnp.allclose(out_f32, ref, atol=1e-4, rtol=1e-4), \
        "f32 kernel mismatch vs reference"

    print("KERNEL_OK")
</pallas_src>

<mosaic_0001>
module attributes {stable_mosaic.version = 11 : i64} {
  func.func @_matmul_bn_kernel(%arg0: i32, %arg1: memref<36x512xbf16, #tpu.memory_space<vmem>>, %arg2: memref<8x36xbf16, #tpu.memory_space<vmem>>, %arg3: memref<8x1xf32, #tpu.memory_space<vmem>>, %arg4: memref<8x512xf32, #tpu.memory_space<vmem>>) attributes {dimension_semantics = [#tpu.dimension_semantics<parallel>], iteration_bounds = array<i64: 1>, scalar_prefetch = 0 : i64, scratch_operands = 0 : i64, tpu.core_type = #tpu.core_type<tc>, window_params = [{transform_indices = @transform_0, window_bounds = array<i64: 36, 512>}, {pipeline_mode = #tpu.pipeline_mode<synchronous>, transform_indices = @transform_1, window_bounds = array<i64: 8, 36>}, {pipeline_mode = #tpu.pipeline_mode<synchronous>, transform_indices = @transform_2, window_bounds = array<i64: 8, 1>}, {transform_indices = @transform_3, window_bounds = array<i64: 8, 512>}]} {
    %c0 = arith.constant 0 : index
    %c0_0 = arith.constant 0 : index
    %0 = vector.load %arg2[%c0, %c0_0] : memref<8x36xbf16, #tpu.memory_space<vmem>>, vector<8x36xbf16>
    %c0_1 = arith.constant 0 : index
    %c0_2 = arith.constant 0 : index
    %1 = vector.load %arg1[%c0_1, %c0_2] : memref<36x512xbf16, #tpu.memory_space<vmem>>, vector<36x512xbf16>
    %cst = arith.constant dense<0.000000e+00> : vector<8x512xf32>
    %2 = tpu.matmul %0, %1, %cst {dimension_numbers = #tpu.dot_dimension_numbers<[1], [0], [0], [1], [0, 0, 1, 1], [], []>} : vector<8x36xbf16>, vector<36x512xbf16>, vector<8x512xf32> -> vector<8x512xf32>
    %c0_3 = arith.constant 0 : index
    %c0_4 = arith.constant 0 : index
    %3 = vector.load %arg3[%c0_3, %c0_4] : memref<8x1xf32, #tpu.memory_space<vmem>>, vector<8x1xf32>
    %4 = vector.broadcast %3 : vector<8x1xf32> to vector<8x512xf32>
    %5 = arith.addf %2, %4 : vector<8x512xf32>
    %c0_5 = arith.constant 0 : index
    %c0_6 = arith.constant 0 : index
    %6 = vector.load %arg4[%c0_5, %c0_6] : memref<8x512xf32, #tpu.memory_space<vmem>>, vector<8x512xf32>
    tpu.vector_store %arg4[%c0_5, %c0_6], %5 {strides = array<i32>} : memref<8x512xf32, #tpu.memory_space<vmem>>, vector<8x512xf32>,
    return
  }
  func.func @transform_0(%arg0: i32) -> (i32, i32) {
    %c0_i32 = arith.constant 0 : i32
    %c0_i32_0 = arith.constant 0 : i32
    return %c0_i32, %arg0 : i32, i32
  }
  func.func @transform_1(%arg0: i32) -> (i32, i32) {
    %c0_i32 = arith.constant 0 : i32
    %c0_i32_0 = arith.constant 0 : i32
    %c0_i32_1 = arith.constant 0 : i32
    return %c0_i32, %c0_i32_0 : i32, i32
  }
  func.func @transform_2(%arg0: i32) -> (i32, i32) {
    %c0_i32 = arith.constant 0 : i32
    %c0_i32_0 = arith.constant 0 : i32
    %c0_i32_1 = arith.constant 0 : i32
    return %c0_i32, %c0_i32_0 : i32, i32
  }
  func.func @transform_3(%arg0: i32) -> (i32, i32) {
    %c0_i32 = arith.constant 0 : i32
    %c0_i32_0 = arith.constant 0 : i32
    return %c0_i32, %arg0 : i32, i32
  }
}

</mosaic_0001>

<llo_original>
// kernel: basic_conv2d.1
$region0: #{basic_conv2d.1}
  #allocation0 [shape = 'u32[]', space=smem, size = 0x4, offset = 0x4, fixed_abs, tag = 'smem constant byte address 0x4 - core index']
  #allocation1 [shape = 'u32[144,128]{1,0:T(1,128)}', space=vmem, size = 0x12000, scoped, tag = 'internal scratch']
  %s0 = inlined_call_operand.vmem [shape: bf16[36,512], index: 0, kind: input, shape index: {}]
  %s1 = inlined_call_operand.vmem [shape: bf16[8,36], index: 1, kind: input, shape index: {}]
  %s2 = inlined_call_operand.vmem [shape: f32[8,1], index: 2, kind: input, shape index: {}]
  %s3 = inlined_call_operand.vmem [shape: f32[8,512], index: 3, kind: output, shape index: {}]
  %s4 = sld [smem:[#allocation0]]
  $region22: #{basic_conv2d.1} parent=0
    _
  %s6 = ssub.s32 1, %s4
  %s7 = scalar_select 0, %s6, %s4
  // Predicated region
  $region2: #{basic_conv2d.1} parent=0 // pred_check
    _
  $region3: #{basic_conv2d.1} parent=0 // pred_check_branch
    %9 = sbr.rel (0) target = $region5
  $region4: #{basic_conv2d.1} parent=0 // pred_region
    _
  $region5: #{basic_conv2d.1} parent=0 // pred_fallthru
    _
  // Predicated region
  $region6: #{basic_conv2d.1} parent=0 // pred_check
    _
  $region7: #{basic_conv2d.1} parent=0 // pred_check_branch
    %11 = sbr.rel (0) target = $region9
  $region8: #{basic_conv2d.1} parent=0 // pred_region
    _
  $region9: #{basic_conv2d.1} parent=0 // pred_fallthru
    _
  // Predicated region
  $region10: #{basic_conv2d.1} parent=0 // pred_check
    _
  $region11: #{basic_conv2d.1} parent=0 // pred_check_branch
    %13 = sbr.rel (0) target = $region13
  $region12: #{basic_conv2d.1} parent=0 // pred_region
    _
  $region13: #{basic_conv2d.1} parent=0 // pred_fallthru
    _
  %v15 = vld [vmem:[%s1] sm:$0xf]
  %v16 = vld [vmem:[%s0] sm:$0xff]
  %v17 = vld [vmem:[%s0 + $0x8] sm:$0xff]
  %v18 = vld [vmem:[%s0 + $0x10] sm:$0xff]
  %v19 = vld [vmem:[%s0 + $0x18] sm:$0xff]
  %v20 = vld [vmem:[%s0 + $0x20] sm:$0xff]
  %v21 = vld [vmem:[%s0 + $0x28] sm:$0xff]
  %v22 = vld [vmem:[%s0 + $0x30] sm:$0xff]
  %v23 = vld [vmem:[%s0 + $0x38] sm:$0xff]
  %v24 = vld [vmem:[%s0 + $0x40] sm:$0x33]
  %v25 = vld [vmem:[%s0 + $0x48] sm:$0x33]
  %v26 = vld [vmem:[%s2] sm:$0xff]
  %28 = vset.pattern.permute.xlu0 0
  %29 = vperm.xlu0 %28, %v26
  %v30 = vpop.permute.xlu0 %29
  %v42 = vunpack.c.l.b16 %v16
  %v43 = vunpack.c.h.b16 %v16
  %v44 = vunpack.c.l.b16 %v17
  %v45 = vunpack.c.h.b16 %v17
  %v46 = vunpack.c.l.b16 %v18
  %v47 = vunpack.c.h.b16 %v18
  %v48 = vunpack.c.l.b16 %v19
  %v49 = vunpack.c.h.b16 %v19
  %v50 = vunpack.c.l.b16 %v20
  %v51 = vunpack.c.h.b16 %v20
  %v52 = vunpack.c.l.b16 %v21
  %v53 = vunpack.c.h.b16 %v21
  %v54 = vunpack.c.l.b16 %v22
  %v55 = vunpack.c.h.b16 %v22
  %v56 = vunpack.c.l.b16 %v23
  %v57 = vunpack.c.h.b16 %v23
  %v58 = vunpack.c.l.b16 %v24
  %v59 = vunpack.c.h.b16 %v24
  %v60 = vunpack.c.l.b16 %v25
  %v61 = vunpack.c.h.b16 %v25
  %v62 = vpack.c.b16 %v46, %v42
  %v63 = vpack.c.b16 %v47, %v43
  %v64 = vpack.c.b16 %v48, %v44
  %v65 = vpack.c.b16 %v49, %v45
  %v66 = vpack.c.b16 %v54, %v50
  %v67 = vpack.c.b16 %v55, %v51
  %v68 = vpack.c.b16 %v56, %v52
  %v69 = vpack.c.b16 %v57, %v53
  %v70 = vpack.c.b16 %v58, %v58
  %v71 = vpack.c.b16 %v59, %v59
  %v72 = vpack.c.b16 %v60, %v60
  %v73 = vpack.c.b16 %v61, %v61
  %vm82 = vcmask 293888
  %v84 = vsel %vm82, %v15, 0
  %vm86 = vcmask 1041408
  %v88 = vsel %vm86, %v70, 0
  %v91 = vsel %vm86, %v71, 0
  %v94 = vsel %vm86, %v72, 0
  %v97 = vsel %vm86, %v73, 0
  %99 = vmatprep.subr.bf16.mxu0 %v63
  %100 = vmatpush1.bf16.msra.mxu0 %v62
  %101 = vmatprep.subr.bf16.mxu0 %v67
  %102 = vmatpush1.bf16.msra.mxu0 %v66
  %103 = vmatprep.subr.bf16.mxu0 %v91
  %104 = vmatpush1.bf16.msra.mxu0 %v88
  %105 = vmatprep.subr.bf16.mxu0 0
  %106 = vmatpush1.bf16.msra.mxu0 0
  %107 = vmatprep.subr.bf16.mxu0 0
  %108 = vmatpush1.bf16.msra.mxu0 0
  %109 = vmatprep.subr.bf16.mxu0 0
  %110 = vmatpush1.bf16.msra.mxu0 0
  %111 = vmatprep.subr.bf16.mxu0 0
  %112 = vmatpush1.bf16.msra.mxu0 0
  %113 = vmatprep.subr.bf16.mxu0 0
  %114 = vmatpush1.bf16.msra.mxu0 0
  %115 = vmatprep.subr.bf16.mxu0 0
  %116 = vmatpush1.bf16.msra.mxu0 0
  %117 = vmatprep.subr.bf16.mxu0 0
  %118 = vmatpush1.bf16.msra.mxu0 0
  %119 = vmatprep.subr.bf16.mxu0 0
  %120 = vmatpush1.bf16.msra.mxu0 0
  %121 = vmatprep.subr.bf16.mxu0 0
  %122 = vmatpush1.bf16.msra.mxu0 0
  %123 = vmatprep.subr.bf16.mxu0 0
  %124 = vmatpush1.bf16.msra.mxu0 0
  %125 = vmatprep.subr.bf16.mxu0 0
  %126 = vmatpush1.bf16.msra.mxu0 0
  %127 = vmatprep.subr.bf16.mxu0 0
  %128 = vmatpush1.bf16.msra.mxu0 0
  %129 = vmatprep.subr.bf16.mxu0 0
  %130 = vmatpush1.bf16.msra.mxu0 0
  %131 = vmatprep.mubr.bf16.mxu0 0
  %132 = vmatmul.mubr.bf16.gmra.mrb[0].mxu0 %v84
  %v133 = vpop.f32.mrb[0].mxu0
  %v134 = vadd.f32 %v30, %v133
  %v135 = vpop.f32.mrb[0].mxu0
  %v136 = vadd.f32 %v30, %v135
  %v137 = vpop.f32.mrb[0].mxu0
  %v138 = vpop.f32.mrb[0].mxu0
  %139 = vdwg.mxu0
  %140 = vmatprep.subr.bf16.mxu0 %v65
  %141 = vmatpush1.bf16.msra.mxu0 %v64
  %142 = vmatprep.subr.bf16.mxu0 %v69
  %143 = vmatpush1.bf16.msra.mxu0 %v68
  %144 = vmatprep.subr.bf16.mxu0 %v97
  %145 = vmatpush1.bf16.msra.mxu0 %v94
  %146 = vmatprep.subr.bf16.mxu0 0
  %147 = vmatpush1.bf16.msra.mxu0 0
  %148 = vmatprep.subr.bf16.mxu0 0
  %149 = vmatpush1.bf16.msra.mxu0 0
  %150 = vmatprep.subr.bf16.mxu0 0
  %151 = vmatpush1.bf16.msra.mxu0 0
  %152 = vmatprep.subr.bf16.mxu0 0
  %153 = vmatpush1.bf16.msra.mxu0 0
  %154 = vmatprep.subr.bf16.mxu0 0
  %155 = vmatpush1.bf16.msra.mxu0 0
  %156 = vmatprep.subr.bf16.mxu0 0
  %157 = vmatpush1.bf16.msra.mxu0 0
  %158 = vmatprep.subr.bf16.mxu0 0
  %159 = vmatpush1.bf16.msra.mxu0 0
  %160 = vmatprep.subr.bf16.mxu0 0
  %161 = vmatpush1.bf16.msra.mxu0 0
  %162 = vmatprep.subr.bf16.mxu0 0
  %163 = vmatpush1.bf16.msra.mxu0 0
  %164 = vmatprep.subr.bf16.mxu0 0
  %165 = vmatpush1.bf16.msra.mxu0 0
  %166 = vmatprep.subr.bf16.mxu0 0
  %167 = vmatpush1.bf16.msra.mxu0 0
  %168 = vmatprep.subr.bf16.mxu0 0
  %169 = vmatpush1.bf16.msra.mxu0 0
  %170 = vmatprep.subr.bf16.mxu0 0
  %171 = vmatpush1.bf16.msra.mxu0 0
  %172 = vmatprep.mubr.bf16.mxu0 0
  %173 = vmatmul.mubr.bf16.gmra.mrb[0].mxu0 %v84
  %v174 = vpop.f32.mrb[0].mxu0
  %v175 = vadd.f32 %v30, %v174
  %v176 = vpop.f32.mrb[0].mxu0
  %v177 = vadd.f32 %v30, %v176
  %v178 = vpop.f32.mrb[0].mxu0
  %v179 = vpop.f32.mrb[0].mxu0
  %180 = vdwg.mxu0
  %181 = vst [vmem:[%s3] sm:$0xff] %v134
  %182 = vst [vmem:[%s3 + $0x8] sm:$0xff] %v136
  %183 = vst [vmem:[%s3 + $0x10] sm:$0xff] %v175
  %184 = vst [vmem:[%s3 + $0x18] sm:$0xff] %v177
  // Predicated region
  $region14: #{basic_conv2d.1} parent=0 // pred_check
    _
  $region15: #{basic_conv2d.1} parent=0 // pred_check_branch
    %186 = sbr.rel (0) target = $region17
  $region16: #{basic_conv2d.1} parent=0 // pred_region
    _
  $region17: #{basic_conv2d.1} parent=0 // pred_fallthru
    _
  // Predicated region
  $region18: #{basic_conv2d.1} parent=0 // pred_check
    _
  $region19: #{basic_conv2d.1} parent=0 // pred_check_branch
    %188 = sbr.rel (0) target = $region21
  $region20: #{basic_conv2d.1} parent=0 // pred_region
    _
  $region21: #{basic_conv2d.1} parent=0 // pred_fallthru
    _

</llo_original>
